<compile_context>
chip_gen: v7x
topology: tpu7x:2x2x1
jax: 0.10.0
libtpu: 0.0.40
codegen_flags: <defaults>
</compile_context>

<pallas_src>
import numpy as np
import jax
import jax.numpy as jnp
from jax.experimental import pallas as pl
from jax.experimental.pallas import tpu as pltpu

NEG_INF = -1e30


# ------------------------- phase 1: PSP pooling kernel -----------------------

def _psp_pool_kernel(x_ref, pt_ref, wk_ref, bk_ref, wv_ref, bv_ref,
                     kp_ref, vp_ref):
    """Accumulate PSP-pooled key / value projections over HW tiles."""
    @pl.when(pl.program_id(1) == 0)
    def _():
        kp_ref[...] = jnp.zeros_like(kp_ref)
        vp_ref[...] = jnp.zeros_like(vp_ref)

    xb = x_ref[...].astype(jnp.bfloat16)                     # (Cin, Tp)
    # f_key (+BN folded, Kc**-0.25 pre-folded) + ReLU, and f_value; both dots
    # are canonical (Cout, Cin) @ (Cin, Tp) with bf16 inputs / f32 accum.
    k = jnp.dot(wk_ref[...], xb,
                preferred_element_type=jnp.float32) + bk_ref[...]
    k = jnp.maximum(k, 0.0)                                  # (Kc, Tp)
    v = jnp.dot(wv_ref[...], xb,
                preferred_element_type=jnp.float32) + bv_ref[...]

    pt = pt_ref[...]                                         # (Tp, S_pad) bf16
    kp_ref[...] += jnp.dot(k.astype(jnp.bfloat16), pt,
                           preferred_element_type=jnp.float32)
    vp_ref[...] += jnp.dot(v.astype(jnp.bfloat16), pt,
                           preferred_element_type=jnp.float32)


# --------------------------- phase 2: attention kernel ------------------------

def _attention_kernel(x_ref, kpt_ref, vp_ref, mask_ref, wk_ref, bk_ref,
                      ww_ref, bw_ref, o_ref):
    xb = x_ref[...].astype(jnp.bfloat16)                     # (Cin, Tq)
    # Shared f_query (= f_key) projection for this query tile.
    q = jnp.dot(wk_ref[...], xb,
                preferred_element_type=jnp.float32) + bk_ref[...]
    q = jnp.maximum(q, 0.0).astype(jnp.bfloat16)             # (Kc, Tq)

    # sim_T: S on sublanes, query positions on lanes.  (S_pad, Kc) @ (Kc, Tq)
    # -- canonical, no compiler transpose of the HW-sized operand.
    sim = jnp.dot(kpt_ref[...], q, preferred_element_type=jnp.float32)
    sim = sim + mask_ref[...]                                # -1e30 on padded rows
    sim = sim - jnp.max(sim, axis=0, keepdims=True)
    e = jnp.exp(sim)
    attn = e * pl.reciprocal(jnp.sum(e, axis=0, keepdims=True), approx=True)

    # ctx: (Vc, S_pad) @ (S_pad, Tq) -- canonical.
    ctx = jnp.dot(vp_ref[...], attn.astype(jnp.bfloat16),
                  preferred_element_type=jnp.float32)        # (Vc, Tq)

    # Final 1x1 conv W: (Co, Vc) @ (Vc, Tq) -> lane-dense f32 output tile.
    o_ref[...] = jnp.dot(ww_ref[...], ctx.astype(jnp.bfloat16),
                         preferred_element_type=jnp.float32) + bw_ref[...]


# ------------------------------ glue / wrapper --------------------------------

def adaptive_pool_matrix(H, W, sizes=(1, 3, 6, 8)):
    """Rows of P reproduce PyTorch AdaptiveAvgPool2d bin boundaries exactly."""
    rows = []
    for s in sizes:
        for i in range(s):
            h0, h1 = (i * H) // s, -(-((i + 1) * H) // s)
            for j in range(s):
                w0, w1 = (j * W) // s, -(-((j + 1) * W) // s)
                m = np.zeros((H, W), dtype=np.float32)
                m[h0:h1, w0:w1] = 1.0 / ((h1 - h0) * (w1 - w0))
                rows.append(m.reshape(-1))
    return np.stack(rows, 0)  # (S, H*W)


def _vmem_limit_bytes(need):
    """Per-generation scoped-VMEM request (no hard 32 MiB clamp)."""
    try:
        cap = int(pltpu.get_tpu_info().vmem_capacity_bytes)
    except Exception:
        cap = 64 << 20                      # conservative (v7x per-core VMEM)
    usable = (cap * 3) // 4                 # leave DMA / compiler headroom
    return int(min(max(4 * int(need), 8 << 20), usable))


def self_attention_block(x_nchw, params, *, key_channels, scale=1,
                         psp_size=(1, 3, 6, 8), pool_tile=None, q_tile=None):
    """Forward pass of _SelfAttentionBlock. x_nchw: (N, C, H, W) float32."""
    if scale > 1:
        # MaxPool2d(kernel_size=(scale, scale)) done in glue.
        x_nchw = jax.lax.reduce_window(
            x_nchw, -jnp.inf, jax.lax.max,
            window_dimensions=(1, 1, scale, scale),
            window_strides=(1, 1, scale, scale), padding='VALID')

    N, Cin, H, W = x_nchw.shape
    HW = H * W
    # TODO(synk): pad HW to a multiple of 128 to support arbitrary spatial sizes.
    assert HW % 128 == 0, "H*W must be a multiple of 128 (vreg lane width)"
    x_flat = x_nchw.reshape(N, Cin, HW)       # channels-first, lane-dense HW

    wk, bk = params['wk_s'], params['bk_s']   # bf16 / f32, Kc**-0.25 folded
    wv, bv = params['wv_b'], params['bv']     # bf16 / f32
    ww, bw = params['ww_b'], params['bw']     # bf16 / f32
    Kc = key_channels
    Vc = wv.shape[0]
    Co = ww.shape[0]

    def pick_tile(t):
        if t is None:                          # production default: 1024 rows
            t = HW if HW <= 1024 else 1024     # (multiple of 256 for the MXU)
        assert t % 128 == 0 and HW % t == 0, "tile must divide HW, %128==0"
        return t
    Tp = pick_tile(pool_tile)
    Tq = pick_tile(q_tile)

    # PSP adaptive-avg-pool matrix, HW-major, lane-padded to a 128 multiple.
    P = adaptive_pool_matrix(H, W, psp_size)   # (S, HW) numpy
    S = P.shape[0]
    S_pad = max(128, -(-S // 128) * 128)
    P_T = np.zeros((HW, S_pad), dtype=np.float32)
    P_T[:, :S] = P.T
    P_T = jnp.asarray(P_T, dtype=jnp.bfloat16)
    mask = np.zeros((S_pad, 1), dtype=np.float32)
    mask[S:, 0] = NEG_INF                      # kill padded pool columns
    mask = jnp.asarray(mask)

    # ------------------------- phase 1: PSP pooling --------------------------
    flops1 = 2 * N * HW * ((Kc + Vc) * Cin + (Kc + Vc) * S_pad)
    bytes1 = (4 * N * Cin * HW + 2 * HW * S_pad
              + 2 * (Kc + Vc) * Cin + 4 * N * (Kc + Vc) * S_pad)
    need1 = (2 * (Cin * Tp * 4 + Tp * S_pad * 2)        # x / P_T tiles (2-buf)
             + 2 * (Kc + Vc) * S_pad * 4                 # resident outputs
             + (Kc + Vc) * (2 * Cin + 8)                 # weights + biases
             + 4 * (Kc + Vc) * Tp * 4)                   # f32 intermediates

    key_p, val_p = pl.pallas_call(
        _psp_pool_kernel,
        out_shape=(jax.ShapeDtypeStruct((N, Kc, S_pad), jnp.float32),
                   jax.ShapeDtypeStruct((N, Vc, S_pad), jnp.float32)),
        grid_spec=pltpu.PrefetchScalarGridSpec(
            num_scalar_prefetch=0,
            grid=(N, HW // Tp),
            in_specs=[
                pl.BlockSpec((pl.Squeezed(), Cin, Tp), lambda n, j: (n, 0, j)),
                pl.BlockSpec((Tp, S_pad), lambda n, j: (j, 0)),
                pl.BlockSpec((Kc, Cin), lambda n, j: (0, 0)),
                pl.BlockSpec((Kc, 1), lambda n, j: (0, 0)),
                pl.BlockSpec((Vc, Cin), lambda n, j: (0, 0)),
                pl.BlockSpec((Vc, 1), lambda n, j: (0, 0)),
            ],
            out_specs=(
                pl.BlockSpec((pl.Squeezed(), Kc, S_pad), lambda n, j: (n, 0, 0)),
                pl.BlockSpec((pl.Squeezed(), Vc, S_pad), lambda n, j: (n, 0, 0)),
            ),
        ),
        compiler_params=pltpu.CompilerParams(
            dimension_semantics=("parallel", "arbitrary"),
            vmem_limit_bytes=_vmem_limit_bytes(need1)),
        cost_estimate=pl.CostEstimate(flops=flops1, transcendentals=0,
                                      bytes_accessed=bytes1),
    )(x_flat, P_T, wk, bk, wv, bv)

    # Tiny per-image transpose of the pooled key (<=256x128) done ONCE here,
    # so phase 2's big (HW-sized) matmul operands never need an XLU transpose.
    key_pT = jnp.swapaxes(key_p, 1, 2).astype(jnp.bfloat16)   # (N, S_pad, Kc)
    val_pb = val_p.astype(jnp.bfloat16)                       # (N, Vc, S_pad)

    # --------------------------- phase 2: attention ---------------------------
    flops2 = 2 * N * HW * (Kc * Cin + Kc * S_pad + Vc * S_pad + Co * Vc)
    trans2 = N * HW * S_pad
    bytes2 = (4 * N * Cin * HW + 2 * N * (Kc + Vc) * S_pad
              + 2 * (Kc * Cin + Co * Vc) + 4 * N * Co * HW)
    need2 = (2 * (Cin * Tq * 4 + Co * Tq * 4)            # x / out tiles (2-buf)
             + 2 * (S_pad * Kc + Vc * S_pad) * 2         # pooled key/value
             + Kc * (2 * Cin + 8) + Co * (2 * Vc + 8)    # weights + biases
             + 6 * S_pad * Tq * 4                        # sim / e / attn
             + (Kc + Vc + Co) * Tq * 4)                  # q / ctx / out f32

    out_flat = pl.pallas_call(
        _attention_kernel,
        out_shape=jax.ShapeDtypeStruct((N, Co, HW), jnp.float32),
        grid_spec=pltpu.PrefetchScalarGridSpec(
            num_scalar_prefetch=0,
            grid=(N, HW // Tq),
            in_specs=[
                pl.BlockSpec((pl.Squeezed(), Cin, Tq), lambda n, q: (n, 0, q)),
                pl.BlockSpec((pl.Squeezed(), S_pad, Kc), lambda n, q: (n, 0, 0)),
                pl.BlockSpec((pl.Squeezed(), Vc, S_pad), lambda n, q: (n, 0, 0)),
                pl.BlockSpec((S_pad, 1), lambda n, q: (0, 0)),
                pl.BlockSpec((Kc, Cin), lambda n, q: (0, 0)),
                pl.BlockSpec((Kc, 1), lambda n, q: (0, 0)),
                pl.BlockSpec((Co, Vc), lambda n, q: (0, 0)),
                pl.BlockSpec((Co, 1), lambda n, q: (0, 0)),
            ],
            out_specs=pl.BlockSpec((pl.Squeezed(), Co, Tq),
                                   lambda n, q: (n, 0, q)),
        ),
        compiler_params=pltpu.CompilerParams(
            dimension_semantics=("parallel", "parallel"),
            vmem_limit_bytes=_vmem_limit_bytes(need2)),
        cost_estimate=pl.CostEstimate(flops=flops2, transcendentals=trans2,
                                      bytes_accessed=bytes2),
    )(x_flat, key_pT, val_pb, mask, wk, bk, ww, bw)

    # Pure reshape back to NCHW -- the kernel already emitted channels-first.
    return out_flat.reshape(N, Co, H, W)


# ------------------------- parameter construction -----------------------------

def make_params(key, in_channels, key_channels, value_channels, out_channels):
    ks = jax.random.split(key, 10)
    eps = 1e-5
    # f_key / f_query: Conv2d(in, key, 1) + BN(key) [eval mode] + ReLU,
    # channels-first: weight (Kc, Cin), bias (Kc, 1).
    wk = jax.random.normal(ks[0], (key_channels, in_channels), jnp.float32) * 0.2
    bk = jax.random.normal(ks[1], (key_channels, 1), jnp.float32) * 0.1
    gamma = 1.0 + 0.1 * jax.random.normal(ks[2], (key_channels,), jnp.float32)
    beta = 0.1 * jax.random.normal(ks[3], (key_channels,), jnp.float32)
    rmean = 0.1 * jax.random.normal(ks[4], (key_channels,), jnp.float32)
    rvar = jnp.abs(jax.random.normal(ks[5], (key_channels,), jnp.float32)) + 0.5
    bn_scale = gamma / jnp.sqrt(rvar + eps)
    wk_f = wk * bn_scale[:, None]
    bk_f = (bk - rmean[:, None]) * bn_scale[:, None] + beta[:, None]
    # f_value: Conv2d(in, value, 1)
    wv = jax.random.normal(ks[6], (value_channels, in_channels), jnp.float32) * 0.2
    bv = jax.random.normal(ks[7], (value_channels, 1), jnp.float32) * 0.1
    # W: Conv2d(value, out, 1)  (PyTorch inits to 0; nonzero here, see header)
    ww = jax.random.normal(ks[8], (out_channels, value_channels), jnp.float32) * 0.2
    bw = jax.random.normal(ks[9], (out_channels, 1), jnp.float32) * 0.1

    # Kernel-side params: 1/sqrt(Kc) folded as Kc**-0.25 into the SHARED
    # key/query weights+bias (ReLU commutes with a positive scale; the factor
    # enters sim via both the query and the pooled key => Kc**-0.5 exactly).
    # Weights stored bf16 for the MXU; biases stay f32.
    s = float(key_channels) ** -0.25
    return dict(
        # kernel params
        wk_s=(wk_f * s).astype(jnp.bfloat16), bk_s=(bk_f * s),
        wv_b=wv.astype(jnp.bfloat16), bv=bv,
        ww_b=ww.astype(jnp.bfloat16), bw=bw,
        # unfolded f32 copies for the pure-JAX reference
        wk=wk_f, bk=bk_f, wv=wv, ww=ww)


# ------------------------------ pure-JAX reference -----------------------------

def reference(x_nchw, params, *, key_channels, psp_size=(1, 3, 6, 8)):
    N, Cin, H, W = x_nchw.shape
    HW = H * W
    xf = x_nchw.reshape(N, Cin, HW)                                   # (N,Cin,HW)
    P = jnp.asarray(adaptive_pool_matrix(H, W, psp_size))             # (S,HW)
    kq = jnp.maximum(jnp.einsum('kc,nch->nkh', params['wk'], xf)
                     + params['bk'][None], 0.0)                       # (N,Kc,HW)
    v = jnp.einsum('vc,nch->nvh', params['wv'], xf) + params['bv'][None]
    key_p = jnp.einsum('nkh,sh->nks', kq, P)                          # (N,Kc,S)
    val_p = jnp.einsum('nvh,sh->nvs', v, P)                           # (N,Vc,S)
    sim = jnp.einsum('nkh,nks->nhs', kq, key_p) * (key_channels ** -0.5)
    attn = jax.nn.softmax(sim, axis=-1)                               # (N,HW,S)
    ctx = jnp.einsum('nhs,nvs->nvh', attn, val_p)                     # (N,Vc,HW)
    out = jnp.einsum('ov,nvh->noh', params['ww'], ctx) + params['bw'][None]
    Co = out.shape[1]
    return out.reshape(N, Co, H, W)


# ----------------------------------- main --------------------------------------

if __name__ == "__main__":
    N, Cin, H, W = 2, 16, 16, 16
    key_channels, value_channels = 8, 16
    out_channels = Cin  # default out_channels=None -> in_channels

    root = jax.random.PRNGKey(0)
    kx, kp = jax.random.split(root)
    x = jax.random.normal(kx, (N, Cin, H, W), jnp.float32)
    params = make_params(kp, Cin, key_channels, value_channels, out_channels)

    # 128-wide tiles so both grids are actually multi-tile at this toy size.
    out = self_attention_block(x, params, key_channels=key_channels, scale=1,
                               pool_tile=128, q_tile=128)
    out = jax.block_until_ready(out)

    ref = reference(x, params, key_channels=key_channels)
    # Tolerance covers bf16 MXU operands (f32 accumulation), the bf16 pooling
    # matrix, and the EUP approximate reciprocal in the softmax normalization.
    np.testing.assert_allclose(np.asarray(out), np.asarray(ref),
                               rtol=2e-2, atol=2e-2)
    assert out.shape == (N, out_channels, H, W)
    print("KERNEL_OK")
</pallas_src>

<mosaic_0001>
module attributes {stable_mosaic.version = 11 : i64} {
  func.func @_psp_pool_kernel(%arg0: i32, %arg1: i32, %arg2: memref<1x16x128xf32, #tpu.memory_space<vmem>>, %arg3: memref<128x128xbf16, #tpu.memory_space<vmem>>, %arg4: memref<8x16xbf16, #tpu.memory_space<vmem>>, %arg5: memref<8x1xf32, #tpu.memory_space<vmem>>, %arg6: memref<16x16xbf16, #tpu.memory_space<vmem>>, %arg7: memref<16x1xf32, #tpu.memory_space<vmem>>, %arg8: memref<1x8x128xf32, #tpu.memory_space<vmem>>, %arg9: memref<1x16x128xf32, #tpu.memory_space<vmem>>) attributes {dimension_semantics = [#tpu.dimension_semantics<parallel>, #tpu.dimension_semantics<arbitrary>], iteration_bounds = array<i64: 2, 2>, scalar_prefetch = 0 : i64, scratch_operands = 0 : i64, tpu.core_type = #tpu.core_type<tc>, window_params = [{transform_indices = @transform_0, window_bounds = array<i64: 1, 16, 128>}, {transform_indices = @transform_1, window_bounds = array<i64: 128, 128>}, {pipeline_mode = #tpu.pipeline_mode<synchronous>, transform_indices = @transform_2, window_bounds = array<i64: 8, 16>}, {pipeline_mode = #tpu.pipeline_mode<synchronous>, transform_indices = @transform_3, window_bounds = array<i64: 8, 1>}, {pipeline_mode = #tpu.pipeline_mode<synchronous>, transform_indices = @transform_4, window_bounds = array<i64: 16, 16>}, {pipeline_mode = #tpu.pipeline_mode<synchronous>, transform_indices = @transform_5, window_bounds = array<i64: 16, 1>}, {transform_indices = @transform_6, window_bounds = array<i64: 1, 8, 128>}, {transform_indices = @transform_7, window_bounds = array<i64: 1, 16, 128>}]} {
    %c0_i32 = arith.constant 0 : i32
    %0 = arith.cmpi eq, %arg1, %c0_i32 : i32
    %1 = arith.extui %0 : i1 to i32
    %c0_i32_0 = arith.constant 0 : i32
    %2 = arith.cmpi ne, %1, %c0_i32_0 : i32
    scf.if %2 {
      %cst_29 = arith.constant 0.000000e+00 : f32
      %35 = vector.broadcast %cst_29 : f32 to vector<8x128xf32>
      %c0_30 = arith.constant 0 : index
      %c0_31 = arith.constant 0 : index
      %c0_32 = arith.constant 0 : index
      %36 = vector.load %arg8[%c0_30, %c0_31, %c0_32] : memref<1x8x128xf32, #tpu.memory_space<vmem>>, vector<1x8x128xf32>
      %37 = vector.shape_cast %36 : vector<1x8x128xf32> to vector<8x128xf32>
      %38 = vector.shape_cast %35 : vector<8x128xf32> to vector<1x8x128xf32>
      tpu.vector_store %arg8[%c0_30, %c0_31, %c0_32], %38 {strides = array<i32>} : memref<1x8x128xf32, #tpu.memory_space<vmem>>, vector<1x8x128xf32>,
      %cst_33 = arith.constant 0.000000e+00 : f32
      %39 = vector.broadcast %cst_33 : f32 to vector<16x128xf32>
      %c0_34 = arith.constant 0 : index
      %c0_35 = arith.constant 0 : index
      %c0_36 = arith.constant 0 : index
      %40 = vector.load %arg9[%c0_34, %c0_35, %c0_36] : memref<1x16x128xf32, #tpu.memory_space<vmem>>, vector<1x16x128xf32>
      %41 = vector.shape_cast %40 : vector<1x16x128xf32> to vector<16x128xf32>
      %42 = vector.shape_cast %39 : vector<16x128xf32> to vector<1x16x128xf32>
      tpu.vector_store %arg9[%c0_34, %c0_35, %c0_36], %42 {strides = array<i32>} : memref<1x16x128xf32, #tpu.memory_space<vmem>>, vector<1x16x128xf32>,
    } else {
    }
    %c0 = arith.constant 0 : index
    %c0_1 = arith.constant 0 : index
    %c0_2 = arith.constant 0 : index
    %3 = vector.load %arg2[%c0, %c0_1, %c0_2] : memref<1x16x128xf32, #tpu.memory_space<vmem>>, vector<1x16x128xf32>
    %4 = vector.shape_cast %3 : vector<1x16x128xf32> to vector<16x128xf32>
    %5 = arith.truncf %4 : vector<16x128xf32> to vector<16x128xbf16>
    %c0_3 = arith.constant 0 : index
    %c0_4 = arith.constant 0 : index
    %6 = vector.load %arg4[%c0_3, %c0_4] : memref<8x16xbf16, #tpu.memory_space<vmem>>, vector<8x16xbf16>
    %cst = arith.constant dense<0.000000e+00> : vector<8x128xf32>
    %7 = tpu.matmul %6, %5, %cst {dimension_numbers = #tpu.dot_dimension_numbers<[1], [0], [0], [1], [0, 0, 1, 1], [], []>} : vector<8x16xbf16>, vector<16x128xbf16>, vector<8x128xf32> -> vector<8x128xf32>
    %c0_5 = arith.constant 0 : index
    %c0_6 = arith.constant 0 : index
    %8 = vector.load %arg5[%c0_5, %c0_6] : memref<8x1xf32, #tpu.memory_space<vmem>>, vector<8x1xf32>
    %9 = vector.broadcast %8 : vector<8x1xf32> to vector<8x128xf32>
    %10 = arith.addf %7, %9 : vector<8x128xf32>
    %cst_7 = arith.constant 0.000000e+00 : f32
    %11 = vector.broadcast %cst_7 : f32 to vector<8x128xf32>
    %12 = arith.maximumf %10, %11 : vector<8x128xf32>
    %c0_8 = arith.constant 0 : index
    %c0_9 = arith.constant 0 : index
    %13 = vector.load %arg6[%c0_8, %c0_9] : memref<16x16xbf16, #tpu.memory_space<vmem>>, vector<16x16xbf16>
    %cst_10 = arith.constant dense<0.000000e+00> : vector<16x128xf32>
    %14 = tpu.matmul %13, %5, %cst_10 {dimension_numbers = #tpu.dot_dimension_numbers<[1], [0], [0], [1], [0, 0, 1, 1], [], []>} : vector<16x16xbf16>, vector<16x128xbf16>, vector<16x128xf32> -> vector<16x128xf32>
    %c0_11 = arith.constant 0 : index
    %c0_12 = arith.constant 0 : index
    %15 = vector.load %arg7[%c0_11, %c0_12] : memref<16x1xf32, #tpu.memory_space<vmem>>, vector<16x1xf32>
    %16 = vector.broadcast %15 : vector<16x1xf32> to vector<16x128xf32>
    %17 = arith.addf %14, %16 : vector<16x128xf32>
    %c0_13 = arith.constant 0 : index
    %c0_14 = arith.constant 0 : index
    %18 = vector.load %arg3[%c0_13, %c0_14] : memref<128x128xbf16, #tpu.memory_space<vmem>>, vector<128x128xbf16>
    %c0_15 = arith.constant 0 : index
    %c0_16 = arith.constant 0 : index
    %c0_17 = arith.constant 0 : index
    %19 = vector.load %arg8[%c0_15, %c0_16, %c0_17] : memref<1x8x128xf32, #tpu.memory_space<vmem>>, vector<1x8x128xf32>
    %20 = vector.shape_cast %19 : vector<1x8x128xf32> to vector<8x128xf32>
    %21 = arith.truncf %12 : vector<8x128xf32> to vector<8x128xbf16>
    %cst_18 = arith.constant dense<0.000000e+00> : vector<8x128xf32>
    %22 = tpu.matmul %21, %18, %cst_18 {dimension_numbers = #tpu.dot_dimension_numbers<[1], [0], [0], [1], [0, 0, 1, 1], [], []>} : vector<8x128xbf16>, vector<128x128xbf16>, vector<8x128xf32> -> vector<8x128xf32>
    %23 = arith.addf %20, %22 : vector<8x128xf32>
    %c0_19 = arith.constant 0 : index
    %c0_20 = arith.constant 0 : index
    %c0_21 = arith.constant 0 : index
    %24 = vector.load %arg8[%c0_19, %c0_20, %c0_21] : memref<1x8x128xf32, #tpu.memory_space<vmem>>, vector<1x8x128xf32>
    %25 = vector.shape_cast %24 : vector<1x8x128xf32> to vector<8x128xf32>
    %26 = vector.shape_cast %23 : vector<8x128xf32> to vector<1x8x128xf32>
    tpu.vector_store %arg8[%c0_19, %c0_20, %c0_21], %26 {strides = array<i32>} : memref<1x8x128xf32, #tpu.memory_space<vmem>>, vector<1x8x128xf32>,
    %c0_22 = arith.constant 0 : index
    %c0_23 = arith.constant 0 : index
    %c0_24 = arith.constant 0 : index
    %27 = vector.load %arg9[%c0_22, %c0_23, %c0_24] : memref<1x16x128xf32, #tpu.memory_space<vmem>>, vector<1x16x128xf32>
    %28 = vector.shape_cast %27 : vector<1x16x128xf32> to vector<16x128xf32>
    %29 = arith.truncf %17 : vector<16x128xf32> to vector<16x128xbf16>
    %cst_25 = arith.constant dense<0.000000e+00> : vector<16x128xf32>
    %30 = tpu.matmul %29, %18, %cst_25 {dimension_numbers = #tpu.dot_dimension_numbers<[1], [0], [0], [1], [0, 0, 1, 1], [], []>} : vector<16x128xbf16>, vector<128x128xbf16>, vector<16x128xf32> -> vector<16x128xf32>
    %31 = arith.addf %28, %30 : vector<16x128xf32>
    %c0_26 = arith.constant 0 : index
    %c0_27 = arith.constant 0 : index
    %c0_28 = arith.constant 0 : index
    %32 = vector.load %arg9[%c0_26, %c0_27, %c0_28] : memref<1x16x128xf32, #tpu.memory_space<vmem>>, vector<1x16x128xf32>
    %33 = vector.shape_cast %32 : vector<1x16x128xf32> to vector<16x128xf32>
    %34 = vector.shape_cast %31 : vector<16x128xf32> to vector<1x16x128xf32>
    tpu.vector_store %arg9[%c0_26, %c0_27, %c0_28], %34 {strides = array<i32>} : memref<1x16x128xf32, #tpu.memory_space<vmem>>, vector<1x16x128xf32>,
    return
  }
  func.func @transform_0(%arg0: i32, %arg1: i32) -> (i32, i32, i32) {
    %c0_i32 = arith.constant 0 : i32
    %c0_i32_0 = arith.constant 0 : i32
    return %arg0, %c0_i32, %arg1 : i32, i32, i32
  }
  func.func @transform_1(%arg0: i32, %arg1: i32) -> (i32, i32) {
    %c0_i32 = arith.constant 0 : i32
    %c0_i32_0 = arith.constant 0 : i32
    return %arg1, %c0_i32 : i32, i32
  }
  func.func @transform_2(%arg0: i32, %arg1: i32) -> (i32, i32) {
    %c0_i32 = arith.constant 0 : i32
    %c0_i32_0 = arith.constant 0 : i32
    %c0_i32_1 = arith.constant 0 : i32
    return %c0_i32, %c0_i32_0 : i32, i32
  }
  func.func @transform_3(%arg0: i32, %arg1: i32) -> (i32, i32) {
    %c0_i32 = arith.constant 0 : i32
    %c0_i32_0 = arith.constant 0 : i32
    %c0_i32_1 = arith.constant 0 : i32
    return %c0_i32, %c0_i32_0 : i32, i32
  }
  func.func @transform_4(%arg0: i32, %arg1: i32) -> (i32, i32) {
    %c0_i32 = arith.constant 0 : i32
    %c0_i32_0 = arith.constant 0 : i32
    %c0_i32_1 = arith.constant 0 : i32
    return %c0_i32, %c0_i32_0 : i32, i32
  }
  func.func @transform_5(%arg0: i32, %arg1: i32) -> (i32, i32) {
    %c0_i32 = arith.constant 0 : i32
    %c0_i32_0 = arith.constant 0 : i32
    %c0_i32_1 = arith.constant 0 : i32
    return %c0_i32, %c0_i32_0 : i32, i32
  }
  func.func @transform_6(%arg0: i32, %arg1: i32) -> (i32, i32, i32) {
    %c0_i32 = arith.constant 0 : i32
    %c0_i32_0 = arith.constant 0 : i32
    %c0_i32_1 = arith.constant 0 : i32
    return %arg0, %c0_i32, %c0_i32_0 : i32, i32, i32
  }
  func.func @transform_7(%arg0: i32, %arg1: i32) -> (i32, i32, i32) {
    %c0_i32 = arith.constant 0 : i32
    %c0_i32_0 = arith.constant 0 : i32
    %c0_i32_1 = arith.constant 0 : i32
    return %arg0, %c0_i32, %c0_i32_0 : i32, i32, i32
  }
}

</mosaic_0001>

<llo_original>
// kernel: tpu_custom_call.1
$region0: #{tpu_custom_call.1}
  #allocation0 [shape = 'u32[]', space=smem, size = 0x4, offset = 0x4, fixed_abs, tag = 'smem constant byte address 0x4 - core index']
  #allocation1 [shape = 'u32[144,128]{1,0:T(1,128)}', space=vmem, size = 0x12000, scoped, tag = 'internal scratch']
  %s0 = inlined_call_operand.hbm [shape: f32[2,16,256], index: 0, kind: input, shape index: {}]
  %s1 = inlined_call_operand.hbm [shape: bf16[256,128], index: 1, kind: input, shape index: {}]
  %s2 = inlined_call_operand.vmem [shape: bf16[8,16], index: 2, kind: input, shape index: {}]
  %s3 = inlined_call_operand.vmem [shape: f32[8,1], index: 3, kind: input, shape index: {}]
  %s4 = inlined_call_operand.vmem [shape: bf16[16,16], index: 4, kind: input, shape index: {}]
  %s5 = inlined_call_operand.vmem [shape: f32[16,1], index: 5, kind: input, shape index: {}]
  %s6 = inlined_call_operand.hbm [shape: f32[2,8,128], index: 6, kind: output, shape index: {0}]
  %s7 = inlined_call_operand.hbm [shape: f32[2,16,128], index: 7, kind: output, shape index: {1}]
  %8 = xla_tuple %s6, %s7
  %s9 = sld [smem:[#allocation0]]
  $region77: #{tpu_custom_call.1} parent=0
    _
  %s11 = ssub.s32 1, %s9
  %s12 = scalar_select 0, %s11, %s9
  $region1: #{tpu_custom_call.1} parent=0
    #allocation2 [shape = 'u8[16384]{0}', space=vmem, size = 0x4000, scoped, tag = 'input window, operand 0']
    #allocation3 [shape = 's32[2]{0}', space=sflag, size = 0x8, scoped, tag = 'scoped memory for tpu_custom_call.1']
    #allocation4 [shape = 's32[2]{0}', space=sflag, size = 0x8, scoped, tag = 'scoped memory for tpu_custom_call.1']
    #allocation5 [shape = 'u8[65536]{0}', space=vmem, size = 0x10000, scoped, tag = 'input window, operand 1']
    #allocation6 [shape = 's32[2]{0}', space=sflag, size = 0x8, scoped, tag = 'scoped memory for tpu_custom_call.1']
    #allocation7 [shape = 'u8[8192]{0}', space=vmem, size = 0x2000, scoped, tag = 'output window, operand 0']
    #allocation8 [shape = 'u8[16384]{0}', space=vmem, size = 0x4000, scoped, tag = 'output window, operand 1']
    #allocation9 [shape = 's32[2]{0}', space=sflag, size = 0x8, scoped, tag = 'scoped memory for tpu_custom_call.1']
    %13 = vsyncpa [#allocation3], 0
    %s14 = scalar_lea.sflag [#allocation3], 1
    %15 = vsyncpa %s14, 0
    %16 = vsyncpa [#allocation6], 0
    %s17 = scalar_lea.sflag [#allocation6], 1
    %18 = vsyncpa %s17, 0
    %19 = vsyncpa [#allocation4], 0
    %s20 = scalar_lea.sflag [#allocation4], 1
    %21 = vsyncpa %s20, 0
    %22 = vsyncpa [#allocation9], 0
    %s23 = scalar_lea.sflag [#allocation9], 1
    %24 = vsyncpa %s23, 0
    loop: start=0, step=1, limit=6
    $region2: #{tpu_custom_call.1} parent=1 // loop_pre_header
      _
    $region3: #{tpu_custom_call.1} parent=1 // loop_header
      %s26 = sphi 0, %s30
      %p27 = scmp.ge.s32.totalorder %s26, 6
      %s33 = sphi 0, %s45
      %s34 = sphi 0, %s41
      %s35 = sphi 0, %s33
      %s36 = sphi 0, %s34
      %s37 = sphi 0, %s35
      %s38 = sphi 0, %s36
      %s50 = sphi 0, %s52
      %s53 = sphi 0, %s50
      %s54 = sphi 0, %s53
      %s70 = sphi 0, %s54
      %s76 = sphi 0, %s78
      %s79 = sphi 0, %s76
      %s80 = sphi 0, %s79
      %s96 = sphi 0, %s80
      %s100 = sphi 0, %s100
      %s102 = sphi 0, %s100
      %s103 = sphi 0, %s102
      %s117 = sphi 0, %s103
      %s121 = sphi 0, %s121
      %s123 = sphi 0, %s121
      %s124 = sphi 0, %s123
      %s138 = sphi 0, %s124
      %s142 = sphi 0, %s142
      %s144 = sphi 0, %s142
      %s145 = sphi 0, %s144
      %s159 = sphi 0, %s145
      %s163 = sphi 0, %s163
      %s165 = sphi 0, %s163
      %s166 = sphi 0, %s165
      %s180 = sphi 0, %s166
      %s186 = sphi 0, %s188
      %s189 = sphi 0, %s186
      %s190 = sphi 0, %s189
      %s206 = sphi 0, %s190
      %s212 = sphi 0, %s214
      %s215 = sphi 0, %s212
      %s216 = sphi 0, %s215
      %s232 = sphi 0, %s216
    $region4: #{tpu_custom_call.1} parent=1 // loop_header_branch
      %29 = sbr.rel (%p27) target = $region8
    $region5: #{tpu_custom_call.1} parent=1 // loop_body
      %s31 = ssub.s32 %s26, 1
      %s32 = ssub.s32 %s26, 2
      %s39 = sadd.s32 1, %s34
      %p40 = scmp.ge.s32.totalorder %s39, 2
      %s41 = scalar_select %p40, 0, %s39
      %s42 = sadd.s32 1, %s33
      %s43 = scalar_select %p40, %s42, %s33
      %p44 = scmp.ge.s32.totalorder %s43, 2
      %s45 = scalar_select %p44, 0, %s43
      %s46 = ssub.s32 %s33, %s45
      %s47 = ssub.s32 %s34, %s41
      %s48 = sor.u32 %s46, %s47
      %p49 = scmp.eq.s32.totalorder %s48, 0
      %s51 = sadd.s32 %s50, 1
      %s52 = scalar_select %p49, %s50, %s51
      %p55 = pneg %p49
      %p56 = scmp.eq.s32.totalorder %s26, 3
      %p57 = por %p55, %p56
      %p58 = scmp.ne.s32.totalorder %s50, %s53
      %p59 = scmp.eq.s32.totalorder %s26, 0
      %p60 = por %p58, %p59
      %p61 = scmp.ne.s32.totalorder %s50, %s53
      %p62 = scmp.eq.s32.totalorder %s31, 3
      %p63 = por %p61, %p62
      %p64 = scmp.ne.s32.totalorder %s53, %s54
      %p65 = scmp.eq.s32.totalorder %s31, 0
      %p66 = por %p64, %p65
      %p67 = scmp.ne.s32.totalorder %s53, %s54
      %p68 = scmp.eq.s32.totalorder %s32, 3
      %p69 = por %p67, %p68
      %p71 = scmp.ne.s32.totalorder %s54, %s70
      %p72 = scmp.eq.s32.totalorder %s32, 0
      %p73 = por %p71, %p72
      %s74 = ssub.s32 %s34, %s41
      %p75 = scmp.eq.s32.totalorder %s74, 0
      %s77 = sadd.s32 %s76, 1
      %s78 = scalar_select %p75, %s76, %s77
      %p81 = pneg %p75
      %p82 = scmp.eq.s32.totalorder %s26, 3
      %p83 = por %p81, %p82
      %p84 = scmp.ne.s32.totalorder %s76, %s79
      %p85 = scmp.eq.s32.totalorder %s26, 0
      %p86 = por %p84, %p85
      %p87 = scmp.ne.s32.totalorder %s76, %s79
      %p88 = scmp.eq.s32.totalorder %s31, 3
      %p89 = por %p87, %p88
      %p90 = scmp.ne.s32.totalorder %s79, %s80
      %p91 = scmp.eq.s32.totalorder %s31, 0
      %p92 = por %p90, %p91
      %p93 = scmp.ne.s32.totalorder %s79, %s80
      %p94 = scmp.eq.s32.totalorder %s32, 3
      %p95 = por %p93, %p94
      %p97 = scmp.ne.s32.totalorder %s80, %s96
      %p98 = scmp.eq.s32.totalorder %s32, 0
      %p99 = por %p97, %p98
      %s101 = sadd.s32 %s100, 1
      %p104 = scmp.eq.s32.totalorder %s26, 3
      %p105 = scmp.ne.s32.totalorder %s100, %s102
      %p106 = scmp.eq.s32.totalorder %s26, 0
      %p107 = por %p105, %p106
      %p108 = scmp.ne.s32.totalorder %s100, %s102
      %p109 = scmp.eq.s32.totalorder %s31, 3
      %p110 = por %p108, %p109
      %p111 = scmp.ne.s32.totalorder %s102, %s103
      %p112 = scmp.eq.s32.totalorder %s31, 0
      %p113 = por %p111, %p112
      %p114 = scmp.ne.s32.totalorder %s102, %s103
      %p115 = scmp.eq.s32.totalorder %s32, 3
      %p116 = por %p114, %p115
      %p118 = scmp.ne.s32.totalorder %s103, %s117
      %p119 = scmp.eq.s32.totalorder %s32, 0
      %p120 = por %p118, %p119
      %s122 = sadd.s32 %s121, 1
      %p125 = scmp.eq.s32.totalorder %s26, 3
      %p126 = scmp.ne.s32.totalorder %s121, %s123
      %p127 = scmp.eq.s32.totalorder %s26, 0
      %p128 = por %p126, %p127
      %p129 = scmp.ne.s32.totalorder %s121, %s123
      %p130 = scmp.eq.s32.totalorder %s31, 3
      %p131 = por %p129, %p130
      %p132 = scmp.ne.s32.totalorder %s123, %s124
      %p133 = scmp.eq.s32.totalorder %s31, 0
      %p134 = por %p132, %p133
      %p135 = scmp.ne.s32.totalorder %s123, %s124
      %p136 = scmp.eq.s32.totalorder %s32, 3
      %p137 = por %p135, %p136
      %p139 = scmp.ne.s32.totalorder %s124, %s138
      %p140 = scmp.eq.s32.totalorder %s32, 0
      %p141 = por %p139, %p140
      %s143 = sadd.s32 %s142, 1
      %p146 = scmp.eq.s32.totalorder %s26, 3
      %p147 = scmp.ne.s32.totalorder %s142, %s144
      %p148 = scmp.eq.s32.totalorder %s26, 0
      %p149 = por %p147, %p148
      %p150 = scmp.ne.s32.totalorder %s142, %s144
      %p151 = scmp.eq.s32.totalorder %s31, 3
      %p152 = por %p150, %p151
      %p153 = scmp.ne.s32.totalorder %s144, %s145
      %p154 = scmp.eq.s32.totalorder %s31, 0
      %p155 = por %p153, %p154
      %p156 = scmp.ne.s32.totalorder %s144, %s145
      %p157 = scmp.eq.s32.totalorder %s32, 3
      %p158 = por %p156, %p157
      %p160 = scmp.ne.s32.totalorder %s145, %s159
      %p161 = scmp.eq.s32.totalorder %s32, 0
      %p162 = por %p160, %p161
      %s164 = sadd.s32 %s163, 1
      %p167 = scmp.eq.s32.totalorder %s26, 3
      %p168 = scmp.ne.s32.totalorder %s163, %s165
      %p169 = scmp.eq.s32.totalorder %s26, 0
      %p170 = por %p168, %p169
      %p171 = scmp.ne.s32.totalorder %s163, %s165
      %p172 = scmp.eq.s32.totalorder %s31, 3
      %p173 = por %p171, %p172
      %p174 = scmp.ne.s32.totalorder %s165, %s166
      %p175 = scmp.eq.s32.totalorder %s31, 0
      %p176 = por %p174, %p175
      %p177 = scmp.ne.s32.totalorder %s165, %s166
      %p178 = scmp.eq.s32.totalorder %s32, 3
      %p179 = por %p177, %p178
      %p181 = scmp.ne.s32.totalorder %s166, %s180
      %p182 = scmp.eq.s32.totalorder %s32, 0
      %p183 = por %p181, %p182
      %s184 = ssub.s32 %s33, %s45
      %p185 = scmp.eq.s32.totalorder %s184, 0
      %s187 = sadd.s32 %s186, 1
      %s188 = scalar_select %p185, %s186, %s187
      %p191 = pneg %p185
      %p192 = scmp.eq.s32.totalorder %s26, 3
      %p193 = por %p191, %p192
      %p194 = scmp.ne.s32.totalorder %s186, %s189
      %p195 = scmp.eq.s32.totalorder %s26, 0
      %p196 = por %p194, %p195
      %p197 = scmp.ne.s32.totalorder %s186, %s189
      %p198 = scmp.eq.s32.totalorder %s31, 3
      %p199 = por %p197, %p198
      %p200 = scmp.ne.s32.totalorder %s189, %s190
      %p201 = scmp.eq.s32.totalorder %s31, 0
      %p202 = por %p200, %p201
      %p203 = scmp.ne.s32.totalorder %s189, %s190
      %p204 = scmp.eq.s32.totalorder %s32, 3
      %p205 = por %p203, %p204
      %p207 = scmp.ne.s32.totalorder %s190, %s206
      %p208 = scmp.eq.s32.totalorder %s32, 0
      %p209 = por %p207, %p208
      %s210 = ssub.s32 %s33, %s45
      %p211 = scmp.eq.s32.totalorder %s210, 0
      %s213 = sadd.s32 %s212, 1
      %s214 = scalar_select %p211, %s212, %s213
      %p217 = pneg %p211
      %p218 = scmp.eq.s32.totalorder %s26, 3
      %p219 = por %p217, %p218
      %p220 = scmp.ne.s32.totalorder %s212, %s215
      %p221 = scmp.eq.s32.totalorder %s26, 0
      %p222 = por %p220, %p221
      %p223 = scmp.ne.s32.totalorder %s212, %s215
      %p224 = scmp.eq.s32.totalorder %s31, 3
      %p225 = por %p223, %p224
      %p226 = scmp.ne.s32.totalorder %s215, %s216
      %p227 = scmp.eq.s32.totalorder %s31, 0
      %p228 = por %p226, %p227
      %p229 = scmp.ne.s32.totalorder %s215, %s216
      %p230 = scmp.eq.s32.totalorder %s32, 3
      %p231 = por %p229, %p230
      %p233 = scmp.ne.s32.totalorder %s216, %s232
      %p234 = scmp.eq.s32.totalorder %s32, 0
      %p235 = por %p233, %p234
      %p236 = scmp.le.s32.totalorder 1, %s26
      %p237 = scmp.lt.s32.totalorder %s26, 5
      %p238 = pnand %p236, %p237
      %p239 = pneg %p238
      // Predicated region
      $region9: #{tpu_custom_call.1} parent=5 // pred_check
        _
      $region10: #{tpu_custom_call.1} parent=5 // pred_check_branch
        %241 = sbr.rel (%p238) target = $region12
      $region11: #{tpu_custom_call.1} parent=5 // pred_region
        %s242 = ssub.s32 %s26, 1
        // Predicated region
        $region13: #{tpu_custom_call.1} parent=11 // pred_check
          %p243 = pneg %p113
        $region14: #{tpu_custom_call.1} parent=11 // pred_check_branch
          %245 = sbr.rel (%p243) target = $region16
        $region15: #{tpu_custom_call.1} parent=11 // pred_region
          _
        $region16: #{tpu_custom_call.1} parent=11 // pred_fallthru
          _
        // Predicated region
        $region17: #{tpu_custom_call.1} parent=11 // pred_check
          %p246 = pneg %p134
        $region18: #{tpu_custom_call.1} parent=11 // pred_check_branch
          %248 = sbr.rel (%p246) target = $region20
        $region19: #{tpu_custom_call.1} parent=11 // pred_region
          _
        $region20: #{tpu_custom_call.1} parent=11 // pred_fallthru
          _
        // Predicated region
        $region21: #{tpu_custom_call.1} parent=11 // pred_check
          %p249 = pneg %p155
        $region22: #{tpu_custom_call.1} parent=11 // pred_check_branch
          %251 = sbr.rel (%p249) target = $region24
        $region23: #{tpu_custom_call.1} parent=11 // pred_region
          _
        $region24: #{tpu_custom_call.1} parent=11 // pred_fallthru
          _
        // Predicated region
        $region25: #{tpu_custom_call.1} parent=11 // pred_check
          %p252 = pneg %p176
        $region26: #{tpu_custom_call.1} parent=11 // pred_check_branch
          %254 = sbr.rel (%p252) target = $region28
        $region27: #{tpu_custom_call.1} parent=11 // pred_region
          _
        $region28: #{tpu_custom_call.1} parent=11 // pred_fallthru
          _
      $region12: #{tpu_custom_call.1} parent=5 // pred_fallthru
        _
      %p255 = scmp.lt.s32.totalorder %s26, 4
      // Predicated region
      $region29: #{tpu_custom_call.1} parent=5 // pred_check
        %p256 = pneg %p255
      $region30: #{tpu_custom_call.1} parent=5 // pred_check_branch
        %258 = sbr.rel (%p256) target = $region32
      $region31: #{tpu_custom_call.1} parent=5 // pred_region
        // Predicated region
        $region33: #{tpu_custom_call.1} parent=31 // pred_check
          %p259 = pneg %p60
        $region34: #{tpu_custom_call.1} parent=31 // pred_check_branch
          %261 = sbr.rel (%p259) target = $region36
        $region35: #{tpu_custom_call.1} parent=31 // pred_region
          %s262 = sand.u32 %s50, 1
          %s263 = scalar_lea.sflag [#allocation3], %s262
          %s264 = sand.u32 %s50, 1
          %s265 = smul.addr %s264, 16
          %s266 = scalar_lea.vmem [#allocation2], %s265
          %s268 = ssub.s32 256, 256
          %269 = vsyncadd %s263, %s268
          %s270 = smul.addr %s33, 4
          %s271 = sadd.s32 %s34, %s270
          %s272 = smul.addr %s271, 128
          %s273 = scalar_lea.hbm %s0, %s272
          %s274 = sshll.u32 %s266, 4
          %s275 = int_to_ptr.vmem [resolvable:$true] %s274
          %280 = dma.hbm_to_vmem [thread:$0]  %s273, 256, %s275, %s263, 256, 128, 8
        $region36: #{tpu_custom_call.1} parent=31 // pred_fallthru
          _
        // Predicated region
        $region37: #{tpu_custom_call.1} parent=31 // pred_check
          %p281 = pneg %p86
        $region38: #{tpu_custom_call.1} parent=31 // pred_check_branch
          %283 = sbr.rel (%p281) target = $region40
        $region39: #{tpu_custom_call.1} parent=31 // pred_region
          %s284 = sand.u32 %s76, 1
          %s285 = scalar_lea.sflag [#allocation6], %s284
          %s286 = sand.u32 %s76, 1
          %s287 = smul.addr %s286, 64
          %s288 = scalar_lea.vmem [#allocation5], %s287
          %s289 = smul.u32 16, %s34
          %s291 = ssub.s32 1024, 1024
          %292 = vsyncadd %s285, %s291
          %s293 = smul.addr %s289, 64
          %s294 = scalar_lea.hbm %s1, %s293
          %s295 = sshll.u32 %s288, 4
          %s296 = int_to_ptr.vmem [resolvable:$true] %s295
          %301 = dma.hbm_to_vmem [thread:$0]  %s294, 1024, %s296, %s285, 64, 64, 4
        $region40: #{tpu_custom_call.1} parent=31 // pred_fallthru
          _
      $region32: #{tpu_custom_call.1} parent=5 // pred_fallthru
        _
      %p302 = scmp.le.s32.totalorder 1, %s26
      %p303 = scmp.lt.s32.totalorder %s26, 5
      %p304 = pnand %p302, %p303
      %p305 = pneg %p304
      // Predicated region
      $region41: #{tpu_custom_call.1} parent=5 // pred_check
        _
      $region42: #{tpu_custom_call.1} parent=5 // pred_check_branch
        %307 = sbr.rel (%p304) target = $region44
      $region43: #{tpu_custom_call.1} parent=5 // pred_region
        %s308 = ssub.s32 %s26, 1
        %s309 = sand.u32 %s53, 1
        %s310 = scalar_lea.sflag [#allocation3], %s309
        %s311 = sand.u32 %s53, 1
        %s312 = smul.addr %s311, 16
        %s313 = scalar_lea.vmem [#allocation2], %s312
        // Predicated region
        $region45: #{tpu_custom_call.1} parent=43 // pred_check
          %p314 = pneg %p66
        $region46: #{tpu_custom_call.1} parent=43 // pred_check_branch
          %316 = sbr.rel (%p314) target = $region48
        $region47: #{tpu_custom_call.1} parent=43 // pred_region
          %317 = dma.done %s310, 256
        $region48: #{tpu_custom_call.1} parent=43 // pred_fallthru
          _
        %s318 = sand.u32 %s79, 1
        %s319 = scalar_lea.sflag [#allocation6], %s318
        %s320 = sand.u32 %s79, 1
        %s321 = smul.addr %s320, 64
        %s322 = scalar_lea.vmem [#allocation5], %s321
        // Predicated region
        $region49: #{tpu_custom_call.1} parent=43 // pred_check
          %p323 = pneg %p92
        $region50: #{tpu_custom_call.1} parent=43 // pred_check_branch
          %325 = sbr.rel (%p323) target = $region52
        $region51: #{tpu_custom_call.1} parent=43 // pred_region
          %326 = dma.done %s319, 1024
        $region52: #{tpu_custom_call.1} parent=43 // pred_fallthru
          _
        %s327 = sand.u32 %s53, 1
        %s328 = scalar_lea.sflag [#allocation3], %s327
        %s329 = sand.u32 %s53, 1
        %s330 = smul.addr %s329, 16
        %s331 = scalar_lea.vmem [#allocation2], %s330
        %p332 = pneg %p66
        %p333 = pneg %p63
        %s334 = sand.u32 %s79, 1
        %s335 = scalar_lea.sflag [#allocation6], %s334
        %s336 = sand.u32 %s79, 1
        %s337 = smul.addr %s336, 64
        %s338 = scalar_lea.vmem [#allocation5], %s337
        %p339 = pneg %p92
        %p340 = pneg %p89
        %p341 = pneg %p113
        %p342 = pneg %p110
        %p343 = pneg %p134
        %p344 = pneg %p131
        %p345 = pneg %p155
        %p346 = pneg %p152
        %p347 = pneg %p176
        %p348 = pneg %p173
        %p349 = pneg %p202
        %p350 = pneg %p199
        %s351 = sand.u32 %s189, 1
        %s352 = scalar_lea.sflag [#allocation4], %s351
        %s353 = sand.u32 %s189, 1
        %s354 = smul.addr %s353, 8
        %s355 = scalar_lea.vmem [#allocation7], %s354
        %p356 = pneg %p228
        %p357 = pneg %p225
        %s358 = sand.u32 %s215, 1
        %s359 = scalar_lea.sflag [#allocation9], %s358
        %s360 = sand.u32 %s215, 1
        %s361 = smul.addr %s360, 16
        %s362 = scalar_lea.vmem [#allocation8], %s361
        %s363 = smul.u32 16, %s36
        %p365 = scmp.eq.s32.totalorder %s36, 0
        // Predicated region
        $region53: #{tpu_custom_call.1} parent=43 // pred_check
          %p366 = pneg %p365
        $region54: #{tpu_custom_call.1} parent=43 // pred_check_branch
          %368 = sbr.rel (%p366) target = $region56
        $region55: #{tpu_custom_call.1} parent=43 // pred_region
          %369 = vst [vmem:[%s355] sm:$0xff] 0.0
          %370 = vst [vmem:[%s362] sm:$0xff] 0.0
          %371 = vst [vmem:[%s362 + $0x8] sm:$0xff] 0.0
        $region56: #{tpu_custom_call.1} parent=43 // pred_fallthru
          _
        %v372 = vld [vmem:[%s313] sm:$0xff]
        %v373 = vld [vmem:[%s313 + $0x8] sm:$0xff]
        %v374 = vpack.c.bf16 %v373, %v372
        %v375 = vld [vmem:[%s2] sm:$0xf]
        %v376 = vld [vmem:[%s3] sm:$0xff]
        %378 = vset.pattern.permute.xlu0 0
        %379 = vperm.xlu0 %378, %v376
        %v380 = vpop.permute.xlu0 %379
        %vm382 = vcmask 130048
        %v384 = vsel %vm382, %v375, 0
        %386 = vmatprep.subr.bf16.mxu0 0
        %387 = vmatpush1.bf16.msra.mxu0 %v374
        %388 = vmatprep.subr.bf16.mxu0 0
        %389 = vmatpush1.bf16.msra.mxu0 0
        %390 = vmatprep.subr.bf16.mxu0 0
        %391 = vmatpush1.bf16.msra.mxu0 0
        %392 = vmatprep.subr.bf16.mxu0 0
        %393 = vmatpush1.bf16.msra.mxu0 0
        %394 = vmatprep.subr.bf16.mxu0 0
        %395 = vmatpush1.bf16.msra.mxu0 0
        %396 = vmatprep.subr.bf16.mxu0 0
        %397 = vmatpush1.bf16.msra.mxu0 0
        %398 = vmatprep.subr.bf16.mxu0 0
        %399 = vmatpush1.bf16.msra.mxu0 0
        %400 = vmatprep.subr.bf16.mxu0 0
        %401 = vmatpush1.bf16.msra.mxu0 0
        %402 = vmatprep.subr.bf16.mxu0 0
        %403 = vmatpush1.bf16.msra.mxu0 0
        %404 = vmatprep.subr.bf16.mxu0 0
        %405 = vmatpush1.bf16.msra.mxu0 0
        %406 = vmatprep.subr.bf16.mxu0 0
        %407 = vmatpush1.bf16.msra.mxu0 0
        %408 = vmatprep.subr.bf16.mxu0 0
        %409 = vmatpush1.bf16.msra.mxu0 0
        %410 = vmatprep.subr.bf16.mxu0 0
        %411 = vmatpush1.bf16.msra.mxu0 0
        %412 = vmatprep.subr.bf16.mxu0 0
        %413 = vmatpush1.bf16.msra.mxu0 0
        %414 = vmatprep.subr.bf16.mxu0 0
        %415 = vmatpush1.bf16.msra.mxu0 0
        %416 = vmatprep.subr.bf16.mxu0 0
        %417 = vmatpush1.bf16.msra.mxu0 0
        %418 = vmatprep.mubr.bf16.mxu0 0
        %419 = vmatmul.mubr.bf16.gmra.mrb[0].mxu0 %v384
        %v420 = vpop.f32.mrb[0].mxu0
        %v421 = vadd.f32 %v380, %v420
        %v422 = vpop.f32.mrb[0].mxu0
        %v423 = vpop.f32.mrb[0].mxu0
        %v424 = vpop.f32.mrb[0].mxu0
        %425 = vdwg.mxu0
        %v426 = vmax.f32 %v421, 0.0
        %v427 = vld [vmem:[%s4] sm:$0xf]
        %v428 = vld [vmem:[%s4 + $0x4] sm:$0xf]
        %v429 = vld [vmem:[%s5] sm:$0xff]
        %v430 = vld [vmem:[%s5 + $0x8] sm:$0xff]
        %432 = vset.pattern.permute.xlu0 0
        %433 = vperm.xlu0 %432, %v429
        %v434 = vpop.permute.xlu0 %433
        %437 = vset.pattern.permute.xlu0 0
        %438 = vperm.xlu0 %437, %v430
        %v439 = vpop.permute.xlu0 %438
        %v443 = vunpack.c.l.b16 %v427
        %v444 = vunpack.c.l.b16 %v428
        %v445 = vpack.c.b16 %v444, %v443
        %v447 = vsel %vm382, %v445, 0
        %449 = vmatprep.subr.bf16.mxu0 0
        %450 = vmatpush1.bf16.msra.mxu0 %v374
        %451 = vmatprep.subr.bf16.mxu0 0
        %452 = vmatpush1.bf16.msra.mxu0 0
        %453 = vmatprep.subr.bf16.mxu0 0
        %454 = vmatpush1.bf16.msra.mxu0 0
        %455 = vmatprep.subr.bf16.mxu0 0
        %456 = vmatpush1.bf16.msra.mxu0 0
        %457 = vmatprep.subr.bf16.mxu0 0
        %458 = vmatpush1.bf16.msra.mxu0 0
        %459 = vmatprep.subr.bf16.mxu0 0
        %460 = vmatpush1.bf16.msra.mxu0 0
        %461 = vmatprep.subr.bf16.mxu0 0
        %462 = vmatpush1.bf16.msra.mxu0 0
        %463 = vmatprep.subr.bf16.mxu0 0
        %464 = vmatpush1.bf16.msra.mxu0 0
        %465 = vmatprep.subr.bf16.mxu0 0
        %466 = vmatpush1.bf16.msra.mxu0 0
        %467 = vmatprep.subr.bf16.mxu0 0
        %468 = vmatpush1.bf16.msra.mxu0 0
        %469 = vmatprep.subr.bf16.mxu0 0
        %470 = vmatpush1.bf16.msra.mxu0 0
        %471 = vmatprep.subr.bf16.mxu0 0
        %472 = vmatpush1.bf16.msra.mxu0 0
        %473 = vmatprep.subr.bf16.mxu0 0
        %474 = vmatpush1.bf16.msra.mxu0 0
        %475 = vmatprep.subr.bf16.mxu0 0
        %476 = vmatpush1.bf16.msra.mxu0 0
        %477 = vmatprep.subr.bf16.mxu0 0
        %478 = vmatpush1.bf16.msra.mxu0 0
        %479 = vmatprep.subr.bf16.mxu0 0
        %480 = vmatpush1.bf16.msra.mxu0 0
        %481 = vmatprep.mubr.bf16.mxu0 0
        %482 = vmatmul.mubr.bf16.gmra.mrb[0].mxu0 %v447
        %v483 = vpop.f32.mrb[0].mxu0
        %v484 = vadd.f32 %v434, %v483
        %v485 = vpop.f32.mrb[0].mxu0
        %v486 = vpop.f32.mrb[0].mxu0
        %v487 = vadd.f32 %v439, %v486
        %v488 = vpop.f32.mrb[0].mxu0
        %489 = vdwg.mxu0
        %v490 = vld [vmem:[%s322] sm:$0xf]
        %v491 = vld [vmem:[%s322 + $0x4] sm:$0xf]
        %v492 = vld [vmem:[%s322 + $0x8] sm:$0xf]
        %v493 = vld [vmem:[%s322 + $0xc] sm:$0xf]
        %v494 = vld [vmem:[%s322 + $0x10] sm:$0xf]
        %v495 = vld [vmem:[%s322 + $0x14] sm:$0xf]
        %v496 = vld [vmem:[%s322 + $0x18] sm:$0xf]
        %v497 = vld [vmem:[%s322 + $0x1c] sm:$0xf]
        %v498 = vld [vmem:[%s322 + $0x20] sm:$0xf]
        %v499 = vld [vmem:[%s322 + $0x24] sm:$0xf]
        %v500 = vld [vmem:[%s322 + $0x28] sm:$0xf]
        %v501 = vld [vmem:[%s322 + $0x2c] sm:$0xf]
        %v502 = vld [vmem:[%s322 + $0x30] sm:$0xf]
        %v503 = vld [vmem:[%s322 + $0x34] sm:$0xf]
        %v504 = vld [vmem:[%s322 + $0x38] sm:$0xf]
        %v505 = vld [vmem:[%s322 + $0x3c] sm:$0xf]
        %v506 = vld [vmem:[%s355] sm:$0xff]
        %v507 = vpack.c.bf16 %v426, %v426
        %v524 = vunpack.c.l.b16 %v490
        %v525 = vunpack.c.l.b16 %v491
        %v526 = vunpack.c.l.b16 %v492
        %v527 = vunpack.c.l.b16 %v493
        %v528 = vunpack.c.l.b16 %v494
        %v529 = vunpack.c.l.b16 %v495
        %v530 = vunpack.c.l.b16 %v496
        %v531 = vunpack.c.l.b16 %v497
        %v532 = vunpack.c.l.b16 %v498
        %v533 = vunpack.c.l.b16 %v499
        %v534 = vunpack.c.l.b16 %v500
        %v535 = vunpack.c.l.b16 %v501
        %v536 = vunpack.c.l.b16 %v502
        %v537 = vunpack.c.l.b16 %v503
        %v538 = vunpack.c.l.b16 %v504
        %v539 = vunpack.c.l.b16 %v505
        %v540 = vpack.c.b16 %v525, %v524
        %v541 = vpack.c.b16 %v527, %v526
        %v542 = vpack.c.b16 %v529, %v528
        %v543 = vpack.c.b16 %v531, %v530
        %v544 = vpack.c.b16 %v533, %v532
        %v545 = vpack.c.b16 %v535, %v534
        %v546 = vpack.c.b16 %v537, %v536
        %v547 = vpack.c.b16 %v539, %v538
        %556 = vmatprep.subr.bf16.mxu0 0
        %557 = vmatpush1.bf16.msra.mxu0 %v540
        %558 = vmatprep.subr.bf16.mxu0 0
        %559 = vmatpush1.bf16.msra.mxu0 %v541
        %560 = vmatprep.subr.bf16.mxu0 0
        %561 = vmatpush1.bf16.msra.mxu0 %v542
        %562 = vmatprep.subr.bf16.mxu0 0
        %563 = vmatpush1.bf16.msra.mxu0 %v543
        %564 = vmatprep.subr.bf16.mxu0 0
        %565 = vmatpush1.bf16.msra.mxu0 %v544
        %566 = vmatprep.subr.bf16.mxu0 0
        %567 = vmatpush1.bf16.msra.mxu0 %v545
        %568 = vmatprep.subr.bf16.mxu0 0
        %569 = vmatpush1.bf16.msra.mxu0 %v546
        %570 = vmatprep.subr.bf16.mxu0 0
        %571 = vmatpush1.bf16.msra.mxu0 %v547
        %572 = vmatprep.subr.bf16.mxu0 0
        %573 = vmatpush1.bf16.msra.mxu0 0
        %574 = vmatprep.subr.bf16.mxu0 0
        %575 = vmatpush1.bf16.msra.mxu0 0
        %576 = vmatprep.subr.bf16.mxu0 0
        %577 = vmatpush1.bf16.msra.mxu0 0
        %578 = vmatprep.subr.bf16.mxu0 0
        %579 = vmatpush1.bf16.msra.mxu0 0
        %580 = vmatprep.subr.bf16.mxu0 0
        %581 = vmatpush1.bf16.msra.mxu0 0
        %582 = vmatprep.subr.bf16.mxu0 0
        %583 = vmatpush1.bf16.msra.mxu0 0
        %584 = vmatprep.subr.bf16.mxu0 0
        %585 = vmatpush1.bf16.msra.mxu0 0
        %586 = vmatprep.subr.bf16.mxu0 0
        %587 = vmatpush1.bf16.msra.mxu0 0
        %588 = vmatprep.mubr.bf16.mxu0 0
        %589 = vmatmul.mubr.bf16.gmra.mrb[0].mxu0 %v507
        %v590 = vpop.f32.mrb[0].mxu0
        %v591 = vadd.f32 0.0, %v590
        %v592 = vpop.f32.mrb[0].mxu0
        %v593 = vpop.f32.mrb[0].mxu0
        %v594 = vpop.f32.mrb[0].mxu0
        %595 = vdwg.mxu0
        %v596 = vadd.f32 %v506, %v591
        %597 = vst [vmem:[%s355] sm:$0xff] %v596
        %v598 = vld [vmem:[%s362] sm:$0xff]
        %v599 = vld [vmem:[%s362 + $0x8] sm:$0xff]
        %v600 = vpack.c.bf16 %v487, %v484
        %601 = vmatprep.subr.bf16.mxu0 0
        %602 = vmatpush1.bf16.msra.mxu0 %v540
        %603 = vmatprep.subr.bf16.mxu0 0
        %604 = vmatpush1.bf16.msra.mxu0 %v541
        %605 = vmatprep.subr.bf16.mxu0 0
        %606 = vmatpush1.bf16.msra.mxu0 %v542
        %607 = vmatprep.subr.bf16.mxu0 0
        %608 = vmatpush1.bf16.msra.mxu0 %v543
        %609 = vmatprep.subr.bf16.mxu0 0
        %610 = vmatpush1.bf16.msra.mxu0 %v544
        %611 = vmatprep.subr.bf16.mxu0 0
        %612 = vmatpush1.bf16.msra.mxu0 %v545
        %613 = vmatprep.subr.bf16.mxu0 0
        %614 = vmatpush1.bf16.msra.mxu0 %v546
        %615 = vmatprep.subr.bf16.mxu0 0
        %616 = vmatpush1.bf16.msra.mxu0 %v547
        %617 = vmatprep.subr.bf16.mxu0 0
        %618 = vmatpush1.bf16.msra.mxu0 0
        %619 = vmatprep.subr.bf16.mxu0 0
        %620 = vmatpush1.bf16.msra.mxu0 0
        %621 = vmatprep.subr.bf16.mxu0 0
        %622 = vmatpush1.bf16.msra.mxu0 0
        %623 = vmatprep.subr.bf16.mxu0 0
        %624 = vmatpush1.bf16.msra.mxu0 0
        %625 = vmatprep.subr.bf16.mxu0 0
        %626 = vmatpush1.bf16.msra.mxu0 0
        %627 = vmatprep.subr.bf16.mxu0 0
        %628 = vmatpush1.bf16.msra.mxu0 0
        %629 = vmatprep.subr.bf16.mxu0 0
        %630 = vmatpush1.bf16.msra.mxu0 0
        %631 = vmatprep.subr.bf16.mxu0 0
        %632 = vmatpush1.bf16.msra.mxu0 0
        %633 = vmatprep.mubr.bf16.mxu0 0
        %634 = vmatmul.mubr.bf16.gmra.mrb[0].mxu0 %v600
        %v635 = vpop.f32.mrb[0].mxu0
        %v636 = vadd.f32 0.0, %v635
        %v637 = vpop.f32.mrb[0].mxu0
        %v638 = vpop.f32.mrb[0].mxu0
        %v639 = vadd.f32 0.0, %v638
        %v640 = vpop.f32.mrb[0].mxu0
        %641 = vdwg.mxu0
        %v642 = vadd.f32 %v598, %v636
        %v643 = vadd.f32 %v599, %v639
        %644 = vst [vmem:[%s362] sm:$0xff] %v642
        %645 = vst [vmem:[%s362 + $0x8] sm:$0xff] %v643
        %s646 = sand.u32 %s189, 1
        %s647 = scalar_lea.sflag [#allocation4], %s646
        %s648 = sand.u32 %s189, 1
        %s649 = smul.addr %s648, 8
        %s650 = scalar_lea.vmem [#allocation7], %s649
        %s651 = sand.u32 %s215, 1
        %s652 = scalar_lea.sflag [#allocation9], %s651
        %s653 = sand.u32 %s215, 1
        %s654 = smul.addr %s653, 16
        %s655 = scalar_lea.vmem [#allocation8], %s654
        // Predicated region
        $region57: #{tpu_custom_call.1} parent=43 // pred_check
          %p656 = pneg %p199
        $region58: #{tpu_custom_call.1} parent=43 // pred_check_branch
          %658 = sbr.rel (%p656) target = $region60
        $region59: #{tpu_custom_call.1} parent=43 // pred_region
          %s660 = ssub.s32 128, 128
          %661 = vsyncadd %s647, %s660
          %s662 = smul.addr %s35, 128
          %s663 = scalar_lea.hbm %s6, %s662
          %s665 = sshll.u32 %s650, 4
          %s666 = int_to_ptr.vmem [resolvable:$true] %s665
          %668 = dma.vmem_to_hbm [thread:$0]  %s666, 128, %s663, %s647
        $region60: #{tpu_custom_call.1} parent=43 // pred_fallthru
          _
        // Predicated region
        $region61: #{tpu_custom_call.1} parent=43 // pred_check
          %p669 = pneg %p225
        $region62: #{tpu_custom_call.1} parent=43 // pred_check_branch
          %671 = sbr.rel (%p669) target = $region64
        $region63: #{tpu_custom_call.1} parent=43 // pred_region
          %s673 = ssub.s32 256, 256
          %674 = vsyncadd %s652, %s673
          %s675 = smul.addr %s35, 2
          %s676 = smul.addr %s675, 128
          %s677 = scalar_lea.hbm %s7, %s676
          %s678 = sshll.u32 %s655, 4
          %s679 = int_to_ptr.vmem [resolvable:$true] %s678
          %684 = dma.vmem_to_hbm [thread:$0]  %s679, 256, %s677, %s652, 128, 128, 8
        $region64: #{tpu_custom_call.1} parent=43 // pred_fallthru
          _
      $region44: #{tpu_custom_call.1} parent=5 // pred_fallthru
        _
      %p685 = scmp.le.s32.totalorder 2, %s26
      // Predicated region
      $region65: #{tpu_custom_call.1} parent=5 // pred_check
        %p686 = pneg %p685
      $region66: #{tpu_custom_call.1} parent=5 // pred_check_branch
        %688 = sbr.rel (%p686) target = $region68
      $region67: #{tpu_custom_call.1} parent=5 // pred_region
        %s689 = ssub.s32 %s26, 2
        // Predicated region
        $region69: #{tpu_custom_call.1} parent=67 // pred_check
          %p690 = pneg %p205
        $region70: #{tpu_custom_call.1} parent=67 // pred_check_branch
          %692 = sbr.rel (%p690) target = $region72
        $region71: #{tpu_custom_call.1} parent=67 // pred_region
          %s693 = sand.u32 %s190, 1
          %s694 = scalar_lea.sflag [#allocation4], %s693
          %s695 = sand.u32 %s190, 1
          %s696 = smul.addr %s695, 8
          %s697 = scalar_lea.vmem [#allocation7], %s696
          %698 = dma.done %s694, 128
        $region72: #{tpu_custom_call.1} parent=67 // pred_fallthru
          _
        // Predicated region
        $region73: #{tpu_custom_call.1} parent=67 // pred_check
          %p699 = pneg %p231
        $region74: #{tpu_custom_call.1} parent=67 // pred_check_branch
          %701 = sbr.rel (%p699) target = $region76
        $region75: #{tpu_custom_call.1} parent=67 // pred_region
          %s702 = sand.u32 %s216, 1
          %s703 = scalar_lea.sflag [#allocation9], %s702
          %s704 = sand.u32 %s216, 1
          %s705 = smul.addr %s704, 16
          %s706 = scalar_lea.vmem [#allocation8], %s705
          %707 = dma.done %s703, 256
        $region76: #{tpu_custom_call.1} parent=67 // pred_fallthru
          _
      $region68: #{tpu_custom_call.1} parent=5 // pred_fallthru
        _
    $region6: #{tpu_custom_call.1} parent=1 // loop_footer
      %s30 = sadd.s32 1, %s26
    $region7: #{tpu_custom_call.1} parent=1 // loop_footer_branch
      %25 = sbr.rel target = $region3
    $region8: #{tpu_custom_call.1} parent=1 // loop_exit
      _
    %708 = vsyncpa [#allocation3], 1
    %s709 = scalar_lea.sflag [#allocation3], 1
    %710 = vsyncpa %s709, 1
    %711 = vsyncpa [#allocation6], 1
    %s712 = scalar_lea.sflag [#allocation6], 1
    %713 = vsyncpa %s712, 1
    %714 = vsyncpa [#allocation4], 1
    %s715 = scalar_lea.sflag [#allocation4], 1
    %716 = vsyncpa %s715, 1
    %717 = vsyncpa [#allocation9], 1
    %s718 = scalar_lea.sflag [#allocation9], 1
    %719 = vsyncpa %s718, 1

</llo_original>
